<compile_context>
chip_gen: v7x
topology: tpu7x:2x2x1
jax: 0.10.0
libtpu: 0.0.40
codegen_flags: <defaults>
</compile_context>

<pallas_src>
import functools
import math

import jax
import jax.numpy as jnp
from jax import lax
from jax.experimental import pallas as pl
from jax.experimental.pallas import tpu as pltpu

_MIB = 1024 * 1024


def _round_up(a, b):
    return ((a + b - 1) // b) * b


def _gelu(x, approximate):
    if approximate:
        # tanh-based GELU: goes to the EUP (separate bundle slot).
        c = math.sqrt(2.0 / math.pi)
        return 0.5 * x * (1.0 + jnp.tanh(c * (x + 0.044715 * x * x * x)))
    # nn.GELU() default: exact erf-based GELU, computed in f32.
    return 0.5 * x * (1.0 + lax.erf(x * (1.0 / math.sqrt(2.0))))


# --------------------------------------------------------------------------
# Kernel bodies
# --------------------------------------------------------------------------

def _ffn_resident_kernel(x_ref, w1_ref, b1_ref, w2_ref, b2_ref, o_ref, *,
                         approximate_gelu):
    """Both weight matrices fully resident in VMEM; grid over row tiles only."""
    h = jnp.dot(x_ref[...], w1_ref[...], preferred_element_type=jnp.float32)
    h = _gelu(h + b1_ref[...], approximate_gelu)
    out = jnp.dot(h.astype(w2_ref.dtype), w2_ref[...],
                  preferred_element_type=jnp.float32)
    o_ref[...] = (out + b2_ref[...]).astype(o_ref.dtype)


def _ffn_streamed_kernel(x_ref, w1_ref, b1_ref, w2_ref, b2_ref, o_ref,
                         *scratch, approximate_gelu):
    """Hidden dim streamed in (E, th)/(th, E) slices; accumulate over h axis.

    If the output dtype is float32 there is no scratch ref and the output
    block itself is used as the accumulator (saves tm*E*4 bytes of VMEM).
    """
    acc_ref = scratch[0] if scratch else o_ref
    h_idx = pl.program_id(1)

    @pl.when(h_idx == 0)
    def _():
        acc_ref[...] = jnp.zeros_like(acc_ref)

    h = jnp.dot(x_ref[...], w1_ref[...], preferred_element_type=jnp.float32)
    h = _gelu(h + b1_ref[...], approximate_gelu)
    acc_ref[...] += jnp.dot(h.astype(w2_ref.dtype), w2_ref[...],
                            preferred_element_type=jnp.float32)

    @pl.when(h_idx == pl.num_programs(1) - 1)
    def _():
        o_ref[...] = (acc_ref[...] + b2_ref[...]).astype(o_ref.dtype)


# --------------------------------------------------------------------------
# Hardware-aware static configuration
# --------------------------------------------------------------------------

def _tpu_generation():
    try:
        kind = jax.devices()[0].device_kind.lower()
    except Exception:
        return "unknown"
    if "v5" in kind and ("lite" in kind or "5e" in kind):
        return "v5e"
    if "v6" in kind:
        return "v6e"
    if "v7" in kind:
        return "v7x"
    return "unknown"


def _vmem_capacity_bytes():
    try:
        return int(pltpu.get_tpu_info().vmem_capacity_bytes)
    except Exception:
        pass
    return 64 * _MIB if _tpu_generation() == "v7x" else 128 * _MIB


def _default_config(gen, vmem_cap):
    if gen == "v5e":
        tm, th = 256, 512          # already MXU-bound at these shapes on v5e
    else:
        tm, th = 512, 512          # crosses the HBM roofline knee on v6e/v7x
    if vmem_cap >= 128 * _MIB:
        vmem_limit = 100 * _MIB    # v5e/v6e: use the 128 MiB physical VMEM
    else:
        vmem_limit = max(32 * _MIB, vmem_cap - 12 * _MIB)  # v7x: ~52 MiB
    return tm, th, vmem_limit


def _pick_th(H, target):
    """Largest lane-aligned (multiple of 128) divisor of H that is <= target."""
    best = None
    d = 128
    cap = min(target, H)
    while d <= cap:
        if H % d == 0:
            best = d
        d += 128
    return best if best is not None else H


def _choose_tiles(M_pad, E, H, in_isz, out_isz, tm_target, th_target,
                  budget, sublane, weights_resident):
    weights_bytes = 2 * E * H * in_isz
    if weights_resident is None:
        resident = weights_bytes <= budget // 3
    else:
        resident = bool(weights_resident)

    tm = min(tm_target, M_pad)

    if resident:
        th = H

        def footprint(tm_):
            return (2 * weights_bytes                       # w1 + w2 buffers
                    + 2 * tm_ * E * (in_isz + out_isz)      # x + out blocks
                    + 2 * (H + E) * 4)                      # biases (f32)
    else:
        th = _pick_th(H, th_target)

        def footprint(tm_):
            return (2 * (tm_ * E + E * th + th * E) * in_isz
                    + 2 * (th + E) * 4
                    + 2 * tm_ * E * out_isz
                    + (0 if out_isz == 4 else tm_ * E * 4))  # f32 scratch acc

    while footprint(tm) > budget and tm > sublane:
        tm = max(sublane, (tm // 2 // sublane) * sublane)
    return resident, tm, th


# --------------------------------------------------------------------------
# Public wrapper
# --------------------------------------------------------------------------

@functools.partial(
    jax.jit,
    static_argnames=("tm_target", "th_target", "compute_dtype",
                     "approximate_gelu", "vmem_limit_bytes", "weights_resident"))
def _feed_forward_jit(x, w1, b1, w2, b2, *, tm_target, th_target, compute_dtype,
                      approximate_gelu, vmem_limit_bytes, weights_resident):
    B, S, E = x.shape
    H = w1.shape[1]
    M = B * S
    out_dtype = x.dtype
    cdt = jnp.dtype(compute_dtype)

    x2d = x.reshape(M, E).astype(cdt)
    w1c = w1.astype(cdt)
    w2c = w2.astype(cdt)
    b1_2d = b1.reshape(1, H).astype(jnp.float32)
    b2_2d = b2.reshape(1, E).astype(jnp.float32)

    in_isz = cdt.itemsize
    out_isz = jnp.dtype(out_dtype).itemsize
    sublane = max(8, 32 // in_isz)          # 8 for f32, 16 for bf16

    # Pad M only to the dtype sublane multiple (tiny copy; weights untouched).
    M_pad = _round_up(M, sublane)
    if M_pad != M:
        x2d = jnp.pad(x2d, ((0, M_pad - M), (0, 0)))

    tm_target = _round_up(max(int(tm_target), sublane), sublane)
    resident, tm_eff, th_eff = _choose_tiles(
        M_pad, E, H, in_isz, out_isz, tm_target, int(th_target),
        int(vmem_limit_bytes), sublane, weights_resident)

    grid0 = pl.cdiv(M_pad, tm_eff)
    use_resident_kernel = resident or th_eff == H

    if use_resident_kernel:
        kernel = functools.partial(_ffn_resident_kernel,
                                   approximate_gelu=approximate_gelu)
        grid = (grid0,)
        in_specs = [
            pl.BlockSpec((tm_eff, E), lambda i: (i, 0)),   # x row tile
            pl.BlockSpec((E, H), lambda i: (0, 0)),        # w1 (resident)
            pl.BlockSpec((1, H), lambda i: (0, 0)),        # b1
            pl.BlockSpec((H, E), lambda i: (0, 0)),        # w2 (resident)
            pl.BlockSpec((1, E), lambda i: (0, 0)),        # b2
        ]
        out_specs = pl.BlockSpec((tm_eff, E), lambda i: (i, 0))
        scratch_shapes = ()
        dim_sem = ("parallel",)
        weight_reads = 1
    else:
        kernel = functools.partial(_ffn_streamed_kernel,
                                   approximate_gelu=approximate_gelu)
        grid = (grid0, H // th_eff)
        in_specs = [
            pl.BlockSpec((tm_eff, E), lambda i, h: (i, 0)),    # x row tile
            pl.BlockSpec((E, th_eff), lambda i, h: (0, h)),    # w1 col slice
            pl.BlockSpec((1, th_eff), lambda i, h: (0, h)),    # b1 slice
            pl.BlockSpec((th_eff, E), lambda i, h: (h, 0)),    # w2 row slice
            pl.BlockSpec((1, E), lambda i, h: (0, 0)),         # b2
        ]
        out_specs = pl.BlockSpec((tm_eff, E), lambda i, h: (i, 0))
        # f32 outputs accumulate directly into the output block.
        scratch_shapes = (() if out_dtype == jnp.float32
                          else (pltpu.VMEM((tm_eff, E), jnp.float32),))
        dim_sem = ("parallel", "arbitrary")
        weight_reads = grid0   # weights re-streamed once per M tile

    cost = pl.CostEstimate(
        flops=int(4 * M_pad * E * H),
        transcendentals=int(M_pad * H),
        bytes_accessed=int(M_pad * E * in_isz
                           + weight_reads * 2 * E * H * in_isz
                           + (H + E) * 4
                           + M_pad * E * out_isz),
    )

    out2d = pl.pallas_call(
        kernel,
        out_shape=jax.ShapeDtypeStruct((M_pad, E), out_dtype),
        grid_spec=pltpu.PrefetchScalarGridSpec(
            num_scalar_prefetch=0,
            grid=grid,
            in_specs=in_specs,
            out_specs=out_specs,
            scratch_shapes=scratch_shapes,
        ),
        compiler_params=pltpu.CompilerParams(
            dimension_semantics=dim_sem,
            vmem_limit_bytes=int(vmem_limit_bytes),
        ),
        cost_estimate=cost,
    )(x2d, w1c, b1_2d, w2c, b2_2d)

    if M_pad != M:
        out2d = out2d[:M]
    return out2d.reshape(B, S, E)


def feed_forward(x, w1, b1, w2, b2, *, tm=None, th=None, compute_dtype="auto",
                 approximate_gelu=False, vmem_limit_bytes=None,
                 weights_resident=None):
    """Fused FFN: x @ w1 + b1 -> GELU -> @ w2 + b2.

    x: [B, S, E]; w1: [E, 4E]; b1: [4E]; w2: [4E, E]; b2: [E].
    """
    _, _, E = x.shape

    gen = _tpu_generation()
    vmem_cap = _vmem_capacity_bytes()
    tm_d, th_d, vmem_d = _default_config(gen, vmem_cap)
    tm_target = tm if tm is not None else tm_d
    th_target = th if th is not None else th_d
    vmem_limit = vmem_limit_bytes if vmem_limit_bytes is not None else vmem_d

    if isinstance(compute_dtype, str) and compute_dtype == "auto":
        cdt = jnp.bfloat16 if (E >= 512 or x.dtype == jnp.bfloat16) else x.dtype
    else:
        cdt = compute_dtype if compute_dtype is not None else x.dtype
    cdt = jnp.dtype(cdt)

    return _feed_forward_jit(
        x, w1, b1, w2, b2,
        tm_target=int(tm_target), th_target=int(th_target),
        compute_dtype=cdt.name, approximate_gelu=bool(approximate_gelu),
        vmem_limit_bytes=int(vmem_limit), weights_resident=weights_resident)


def init_params(key, emb_dim, dtype=jnp.float32):
    """Deterministic init mimicking nn.Linear's uniform(-1/sqrt(in), 1/sqrt(in))."""
    hidden = emb_dim * 4
    k1, k2, k3, k4 = jax.random.split(key, 4)
    lim1 = 1.0 / math.sqrt(emb_dim)
    lim2 = 1.0 / math.sqrt(hidden)
    # Stored as [in, out] (transpose of PyTorch's [out, in]).
    w1 = jax.random.uniform(k1, (emb_dim, hidden), dtype, -lim1, lim1)
    b1 = jax.random.uniform(k2, (hidden,), dtype, -lim1, lim1)
    w2 = jax.random.uniform(k3, (hidden, emb_dim), dtype, -lim2, lim2)
    b2 = jax.random.uniform(k4, (emb_dim,), dtype, -lim2, lim2)
    return w1, b1, w2, b2


if __name__ == "__main__":
    key = jax.random.PRNGKey(0)
    k_x, k_p = jax.random.split(key)

    # Small but lane-dense: emb_dim = 128 -> hidden = 512.  S=7 makes
    # M = B*S = 14 non-multiple-of-8 to exercise the sublane pad.
    B, S, E = 2, 7, 128
    x = jax.random.normal(k_x, (B, S, E), dtype=jnp.float32)
    w1, b1, w2, b2 = init_params(k_p, E)

    # Reference in plain JAX (f32, exact GELU).
    ref = _gelu(x.reshape(-1, E) @ w1 + b1, approximate=False) @ w2 + b2
    ref = ref.reshape(B, S, E)

    # 1) Auto config: small E -> f32 compute, weights-resident fast path.
    out = jax.block_until_ready(feed_forward(x, w1, b1, w2, b2))
    assert out.shape == (B, S, E)
    assert jnp.allclose(out, ref, atol=1e-4, rtol=1e-4)

    # 2) Force the H-streamed path (4 accumulation steps, f32 output
    #    accumulates directly into the output block -- no scratch).
    out_s = jax.block_until_ready(
        feed_forward(x, w1, b1, w2, b2, tm=256, th=128,
                     compute_dtype=jnp.float32, weights_resident=False,
                     vmem_limit_bytes=32 * 1024 * 1024))
    assert jnp.allclose(out_s, ref, atol=1e-4, rtol=1e-4)

    # 3) bf16 compute path (streamed, f32 VMEM scratch accumulator, 16-row
    #    sublane padding).  Looser tolerance vs. the f32 reference.
    x_bf = x.astype(jnp.bfloat16)
    out_bf = jax.block_until_ready(
        feed_forward(x_bf, w1, b1, w2, b2, th=128, weights_resident=False))
    assert out_bf.dtype == jnp.bfloat16
    assert jnp.allclose(out_bf.astype(jnp.float32), ref, atol=8e-2, rtol=8e-2)

    print("KERNEL_OK")
</pallas_src>

<mosaic_0001>
module attributes {stable_mosaic.version = 11 : i64} {
  func.func @_ffn_resident_kernel(%arg0: i32, %arg1: memref<16x128xf32, #tpu.memory_space<vmem>>, %arg2: memref<128x512xf32, #tpu.memory_space<vmem>>, %arg3: memref<1x512xf32, #tpu.memory_space<vmem>>, %arg4: memref<512x128xf32, #tpu.memory_space<vmem>>, %arg5: memref<1x128xf32, #tpu.memory_space<vmem>>, %arg6: memref<16x128xf32, #tpu.memory_space<vmem>>) attributes {dimension_semantics = [#tpu.dimension_semantics<parallel>], iteration_bounds = array<i64: 1>, scalar_prefetch = 0 : i64, scratch_operands = 0 : i64, tpu.core_type = #tpu.core_type<tc>, window_params = [{transform_indices = @transform_0, window_bounds = array<i64: 16, 128>}, {pipeline_mode = #tpu.pipeline_mode<synchronous>, transform_indices = @transform_1, window_bounds = array<i64: 128, 512>}, {pipeline_mode = #tpu.pipeline_mode<synchronous>, transform_indices = @transform_2, window_bounds = array<i64: 1, 512>}, {pipeline_mode = #tpu.pipeline_mode<synchronous>, transform_indices = @transform_3, window_bounds = array<i64: 512, 128>}, {pipeline_mode = #tpu.pipeline_mode<synchronous>, transform_indices = @transform_4, window_bounds = array<i64: 1, 128>}, {transform_indices = @transform_5, window_bounds = array<i64: 16, 128>}]} {
    %c0 = arith.constant 0 : index
    %c0_0 = arith.constant 0 : index
    %0 = vector.load %arg1[%c0, %c0_0] : memref<16x128xf32, #tpu.memory_space<vmem>>, vector<16x128xf32>
    %c0_1 = arith.constant 0 : index
    %c0_2 = arith.constant 0 : index
    %1 = vector.load %arg2[%c0_1, %c0_2] : memref<128x512xf32, #tpu.memory_space<vmem>>, vector<128x512xf32>
    %cst = arith.constant dense<0.000000e+00> : vector<16x512xf32>
    %2 = tpu.matmul %0, %1, %cst {dimension_numbers = #tpu.dot_dimension_numbers<[1], [0], [0], [1], [0, 0, 1, 1], [], []>} : vector<16x128xf32>, vector<128x512xf32>, vector<16x512xf32> -> vector<16x512xf32>
    %c0_3 = arith.constant 0 : index
    %c0_4 = arith.constant 0 : index
    %3 = vector.load %arg3[%c0_3, %c0_4] : memref<1x512xf32, #tpu.memory_space<vmem>>, vector<1x512xf32>
    %4 = vector.broadcast %3 : vector<1x512xf32> to vector<16x512xf32>
    %5 = arith.addf %2, %4 : vector<16x512xf32>
    %cst_5 = arith.constant 5.000000e-01 : f32
    %6 = vector.broadcast %cst_5 : f32 to vector<16x512xf32>
    %7 = arith.mulf %6, %5 : vector<16x512xf32>
    %cst_6 = arith.constant 0.707106769 : f32
    %8 = vector.broadcast %cst_6 : f32 to vector<16x512xf32>
    %9 = arith.mulf %5, %8 : vector<16x512xf32>
    %10 = math.erf %9 : vector<16x512xf32>
    %cst_7 = arith.constant 1.000000e+00 : f32
    %11 = vector.broadcast %cst_7 : f32 to vector<16x512xf32>
    %12 = arith.addf %11, %10 : vector<16x512xf32>
    %13 = arith.mulf %7, %12 : vector<16x512xf32>
    %c0_8 = arith.constant 0 : index
    %c0_9 = arith.constant 0 : index
    %14 = vector.load %arg4[%c0_8, %c0_9] : memref<512x128xf32, #tpu.memory_space<vmem>>, vector<512x128xf32>
    %cst_10 = arith.constant dense<0.000000e+00> : vector<16x128xf32>
    %15 = tpu.matmul %13, %14, %cst_10 {dimension_numbers = #tpu.dot_dimension_numbers<[1], [0], [0], [1], [0, 0, 1, 1], [], []>} : vector<16x512xf32>, vector<512x128xf32>, vector<16x128xf32> -> vector<16x128xf32>
    %c0_11 = arith.constant 0 : index
    %c0_12 = arith.constant 0 : index
    %16 = vector.load %arg5[%c0_11, %c0_12] : memref<1x128xf32, #tpu.memory_space<vmem>>, vector<1x128xf32>
    %17 = vector.broadcast %16 : vector<1x128xf32> to vector<16x128xf32>
    %18 = arith.addf %15, %17 : vector<16x128xf32>
    %c0_13 = arith.constant 0 : index
    %c0_14 = arith.constant 0 : index
    %19 = vector.load %arg6[%c0_13, %c0_14] : memref<16x128xf32, #tpu.memory_space<vmem>>, vector<16x128xf32>
    tpu.vector_store %arg6[%c0_13, %c0_14], %18 {strides = array<i32>} : memref<16x128xf32, #tpu.memory_space<vmem>>, vector<16x128xf32>,
    return
  }
  func.func @transform_0(%arg0: i32) -> (i32, i32) {
    %c0_i32 = arith.constant 0 : i32
    %c0_i32_0 = arith.constant 0 : i32
    return %arg0, %c0_i32 : i32, i32
  }
  func.func @transform_1(%arg0: i32) -> (i32, i32) {
    %c0_i32 = arith.constant 0 : i32
    %c0_i32_0 = arith.constant 0 : i32
    %c0_i32_1 = arith.constant 0 : i32
    return %c0_i32, %c0_i32_0 : i32, i32
  }
  func.func @transform_2(%arg0: i32) -> (i32, i32) {
    %c0_i32 = arith.constant 0 : i32
    %c0_i32_0 = arith.constant 0 : i32
    %c0_i32_1 = arith.constant 0 : i32
    return %c0_i32, %c0_i32_0 : i32, i32
  }
  func.func @transform_3(%arg0: i32) -> (i32, i32) {
    %c0_i32 = arith.constant 0 : i32
    %c0_i32_0 = arith.constant 0 : i32
    %c0_i32_1 = arith.constant 0 : i32
    return %c0_i32, %c0_i32_0 : i32, i32
  }
  func.func @transform_4(%arg0: i32) -> (i32, i32) {
    %c0_i32 = arith.constant 0 : i32
    %c0_i32_0 = arith.constant 0 : i32
    %c0_i32_1 = arith.constant 0 : i32
    return %c0_i32, %c0_i32_0 : i32, i32
  }
  func.func @transform_5(%arg0: i32) -> (i32, i32) {
    %c0_i32 = arith.constant 0 : i32
    %c0_i32_0 = arith.constant 0 : i32
    return %arg0, %c0_i32 : i32, i32
  }
}

</mosaic_0001>

<llo_original>
// kernel: _feed_forward_jit.1
$region0: #{_feed_forward_jit.1}
  #allocation0 [shape = 'u32[]', space=smem, size = 0x4, offset = 0x4, fixed_abs, tag = 'smem constant byte address 0x4 - core index']
  #allocation1 [shape = 'u32[144,128]{1,0:T(1,128)}', space=vmem, size = 0x12000, scoped, tag = 'internal scratch']
  %s0 = inlined_call_operand.hbm [shape: f32[16,128], index: 0, kind: input, shape index: {}]
  %s1 = inlined_call_operand.hbm [shape: f32[128,512], index: 1, kind: input, shape index: {}]
  %s2 = inlined_call_operand.hbm [shape: f32[1,512], index: 2, kind: input, shape index: {}]
  %s3 = inlined_call_operand.hbm [shape: f32[512,128], index: 3, kind: input, shape index: {}]
  %s4 = inlined_call_operand.hbm [shape: f32[1,128], index: 4, kind: input, shape index: {}]
  %s5 = inlined_call_operand.hbm [shape: f32[16,128], index: 5, kind: output, shape index: {}]
  %s6 = sld [smem:[#allocation0]]
  $region50: #{_feed_forward_jit.1} parent=0
    _
  %s8 = ssub.s32 1, %s6
  %s9 = scalar_select 0, %s8, %s6
  $region1: #{_feed_forward_jit.1} parent=0
    #allocation2 [shape = 'u8[8192]{0}', space=vmem, size = 0x2000, scoped, tag = 'input window, operand 0, single buffered']
    #allocation3 [shape = 's32[1]{0}', space=sflag, size = 0x4, scoped, tag = 'scoped memory for _feed_forward_jit.1']
    #allocation4 [shape = 's32[1]{0}', space=sflag, size = 0x4, scoped, tag = 'scoped memory for _feed_forward_jit.1']
    #allocation5 [shape = 'u8[262144]{0}', space=vmem, size = 0x40000, scoped, tag = 'input window, operand 1, single buffered']
    #allocation6 [shape = 's32[1]{0}', space=sflag, size = 0x4, scoped, tag = 'scoped memory for _feed_forward_jit.1']
    #allocation7 [shape = 'u8[2048]{0}', space=vmem, size = 0x800, scoped, tag = 'input window, operand 2, single buffered']
    #allocation8 [shape = 'u8[262144]{0}', space=vmem, size = 0x40000, scoped, tag = 'input window, operand 3, single buffered']
    #allocation9 [shape = 's32[1]{0}', space=sflag, size = 0x4, scoped, tag = 'scoped memory for _feed_forward_jit.1']
    #allocation10 [shape = 'u8[512]{0}', space=vmem, size = 0x400, scoped, tag = 'input window, operand 4, single buffered']
    #allocation11 [shape = 'u8[8192]{0}', space=vmem, size = 0x2000, scoped, tag = 'output window, operand 0, single buffered']
    %10 = vsyncpa [#allocation3], 0
    %11 = vsyncpa [#allocation6], 0
    %12 = vsyncpa [#allocation9], 0
    %13 = vsyncpa [#allocation4], 0
    // Predicated region
    $region2: #{_feed_forward_jit.1} parent=1 // pred_check
      _
    $region3: #{_feed_forward_jit.1} parent=1 // pred_check_branch
      %15 = sbr.rel (0) target = $region5
    $region4: #{_feed_forward_jit.1} parent=1 // pred_region
      %s17 = ssub.s32 256, 256
      %18 = vsyncadd [#allocation3], %s17
      %s19 = sshll.u32 [#allocation2], 4
      %s20 = int_to_ptr.vmem [resolvable:$true] %s19
      %25 = dma.hbm_to_vmem [thread:$0]  %s0, 256, %s20, [#allocation3], 128, 128, 8
    $region5: #{_feed_forward_jit.1} parent=1 // pred_fallthru
      _
    // Predicated region
    $region6: #{_feed_forward_jit.1} parent=1 // pred_check
      _
    $region7: #{_feed_forward_jit.1} parent=1 // pred_check_branch
      %27 = sbr.rel (0) target = $region9
    $region8: #{_feed_forward_jit.1} parent=1 // pred_region
      %s29 = ssub.s32 8192, 8192
      %30 = vsyncadd [#allocation6], %s29
      %s31 = sshll.u32 [#allocation5], 4
      %s32 = int_to_ptr.vmem [resolvable:$true] %s31
      %37 = dma.hbm_to_vmem [thread:$0]  %s1, 8192, %s32, [#allocation6], 512, 512, 32
    $region9: #{_feed_forward_jit.1} parent=1 // pred_fallthru
      _
    // Predicated region
    $region10: #{_feed_forward_jit.1} parent=1 // pred_check
      _
    $region11: #{_feed_forward_jit.1} parent=1 // pred_check_branch
      %39 = sbr.rel (0) target = $region13
    $region12: #{_feed_forward_jit.1} parent=1 // pred_region
      %s41 = ssub.s32 64, 64
      %42 = vsyncadd [#allocation6], %s41
      %s44 = sshll.u32 [#allocation7], 4
      %s45 = int_to_ptr.vmem [resolvable:$true] %s44
      %47 = dma.hbm_to_vmem [thread:$0]  %s2, 64, %s45, [#allocation6]
    $region13: #{_feed_forward_jit.1} parent=1 // pred_fallthru
      _
    // Predicated region
    $region14: #{_feed_forward_jit.1} parent=1 // pred_check
      _
    $region15: #{_feed_forward_jit.1} parent=1 // pred_check_branch
      %49 = sbr.rel (0) target = $region17
    $region16: #{_feed_forward_jit.1} parent=1 // pred_region
      %s51 = ssub.s32 8192, 8192
      %52 = vsyncadd [#allocation9], %s51
      %s53 = sshll.u32 [#allocation8], 4
      %s54 = int_to_ptr.vmem [resolvable:$true] %s53
      %59 = dma.hbm_to_vmem [thread:$0]  %s3, 8192, %s54, [#allocation9], 128, 128, 8
    $region17: #{_feed_forward_jit.1} parent=1 // pred_fallthru
      _
    // Predicated region
    $region18: #{_feed_forward_jit.1} parent=1 // pred_check
      _
    $region19: #{_feed_forward_jit.1} parent=1 // pred_check_branch
      %61 = sbr.rel (0) target = $region21
    $region20: #{_feed_forward_jit.1} parent=1 // pred_region
      %s63 = ssub.s32 16, 16
      %64 = vsyncadd [#allocation9], %s63
      %s66 = sshll.u32 [#allocation10], 4
      %s67 = int_to_ptr.vmem [resolvable:$true] %s66
      %69 = dma.hbm_to_vmem [thread:$0]  %s4, 16, %s67, [#allocation9]
    $region21: #{_feed_forward_jit.1} parent=1 // pred_fallthru
      _
    // Predicated region
    $region22: #{_feed_forward_jit.1} parent=1 // pred_check
      _
    $region23: #{_feed_forward_jit.1} parent=1 // pred_check_branch
      %71 = sbr.rel (0) target = $region25
    $region24: #{_feed_forward_jit.1} parent=1 // pred_region
      %72 = dma.done [#allocation3], 256
    $region25: #{_feed_forward_jit.1} parent=1 // pred_fallthru
      _
    // Predicated region
    $region26: #{_feed_forward_jit.1} parent=1 // pred_check
      _
    $region27: #{_feed_forward_jit.1} parent=1 // pred_check_branch
      %74 = sbr.rel (0) target = $region29
    $region28: #{_feed_forward_jit.1} parent=1 // pred_region
      %75 = dma.done [#allocation6], 8192
    $region29: #{_feed_forward_jit.1} parent=1 // pred_fallthru
      _
    // Predicated region
    $region30: #{_feed_forward_jit.1} parent=1 // pred_check
      _
    $region31: #{_feed_forward_jit.1} parent=1 // pred_check_branch
      %77 = sbr.rel (0) target = $region33
    $region32: #{_feed_forward_jit.1} parent=1 // pred_region
      %78 = dma.done [#allocation6], 64
    $region33: #{_feed_forward_jit.1} parent=1 // pred_fallthru
      _
    // Predicated region
    $region34: #{_feed_forward_jit.1} parent=1 // pred_check
      _
    $region35: #{_feed_forward_jit.1} parent=1 // pred_check_branch
      %80 = sbr.rel (0) target = $region37
    $region36: #{_feed_forward_jit.1} parent=1 // pred_region
      %81 = dma.done [#allocation9], 8192
    $region37: #{_feed_forward_jit.1} parent=1 // pred_fallthru
      _
    // Predicated region
    $region38: #{_feed_forward_jit.1} parent=1 // pred_check
      _
    $region39: #{_feed_forward_jit.1} parent=1 // pred_check_branch
      %83 = sbr.rel (0) target = $region41
    $region40: #{_feed_forward_jit.1} parent=1 // pred_region
      %84 = dma.done [#allocation9], 16
    $region41: #{_feed_forward_jit.1} parent=1 // pred_fallthru
      _
    %v85 = vld [vmem:[#allocation2] sm:$0xff]
    %v86 = vld [vmem:[#allocation2 + $0x8] sm:$0xff]
    %v87 = vld [vmem:[#allocation5] sm:$0xff]
    %v88 = vld [vmem:[#allocation5 + $0x8] sm:$0xff]
    %v89 = vld [vmem:[#allocation5 + $0x10] sm:$0xff]
    %v90 = vld [vmem:[#allocation5 + $0x18] sm:$0xff]
    %v91 = vld [vmem:[#allocation5 + $0x20] sm:$0xff]
    %v92 = vld [vmem:[#allocation5 + $0x28] sm:$0xff]
    %v93 = vld [vmem:[#allocation5 + $0x30] sm:$0xff]
    %v94 = vld [vmem:[#allocation5 + $0x38] sm:$0xff]
    %v95 = vld [vmem:[#allocation5 + $0x40] sm:$0xff]
    %v96 = vld [vmem:[#allocation5 + $0x48] sm:$0xff]
    %v97 = vld [vmem:[#allocation5 + $0x50] sm:$0xff]
    %v98 = vld [vmem:[#allocation5 + $0x58] sm:$0xff]
    %v99 = vld [vmem:[#allocation5 + $0x60] sm:$0xff]
    %v100 = vld [vmem:[#allocation5 + $0x68] sm:$0xff]
    %v101 = vld [vmem:[#allocation5 + $0x70] sm:$0xff]
    %v102 = vld [vmem:[#allocation5 + $0x78] sm:$0xff]
    %v103 = vld [vmem:[#allocation5 + $0x80] sm:$0xff]
    %v104 = vld [vmem:[#allocation5 + $0x88] sm:$0xff]
    %v105 = vld [vmem:[#allocation5 + $0x90] sm:$0xff]
    %v106 = vld [vmem:[#allocation5 + $0x98] sm:$0xff]
    %v107 = vld [vmem:[#allocation5 + $0xa0] sm:$0xff]
    %v108 = vld [vmem:[#allocation5 + $0xa8] sm:$0xff]
    %v109 = vld [vmem:[#allocation5 + $0xb0] sm:$0xff]
    %v110 = vld [vmem:[#allocation5 + $0xb8] sm:$0xff]
    %v111 = vld [vmem:[#allocation5 + $0xc0] sm:$0xff]
    %v112 = vld [vmem:[#allocation5 + $0xc8] sm:$0xff]
    %v113 = vld [vmem:[#allocation5 + $0xd0] sm:$0xff]
    %v114 = vld [vmem:[#allocation5 + $0xd8] sm:$0xff]
    %v115 = vld [vmem:[#allocation5 + $0xe0] sm:$0xff]
    %v116 = vld [vmem:[#allocation5 + $0xe8] sm:$0xff]
    %v117 = vld [vmem:[#allocation5 + $0xf0] sm:$0xff]
    %v118 = vld [vmem:[#allocation5 + $0xf8] sm:$0xff]
    %v119 = vld [vmem:[#allocation5 + $0x100] sm:$0xff]
    %v120 = vld [vmem:[#allocation5 + $0x108] sm:$0xff]
    %v121 = vld [vmem:[#allocation5 + $0x110] sm:$0xff]
    %v122 = vld [vmem:[#allocation5 + $0x118] sm:$0xff]
    %v123 = vld [vmem:[#allocation5 + $0x120] sm:$0xff]
    %v124 = vld [vmem:[#allocation5 + $0x128] sm:$0xff]
    %v125 = vld [vmem:[#allocation5 + $0x130] sm:$0xff]
    %v126 = vld [vmem:[#allocation5 + $0x138] sm:$0xff]
    %v127 = vld [vmem:[#allocation5 + $0x140] sm:$0xff]
    %v128 = vld [vmem:[#allocation5 + $0x148] sm:$0xff]
    %v129 = vld [vmem:[#allocation5 + $0x150] sm:$0xff]
    %v130 = vld [vmem:[#allocation5 + $0x158] sm:$0xff]
    %v131 = vld [vmem:[#allocation5 + $0x160] sm:$0xff]
    %v132 = vld [vmem:[#allocation5 + $0x168] sm:$0xff]
    %v133 = vld [vmem:[#allocation5 + $0x170] sm:$0xff]
    %v134 = vld [vmem:[#allocation5 + $0x178] sm:$0xff]
    %v135 = vld [vmem:[#allocation5 + $0x180] sm:$0xff]
    %v136 = vld [vmem:[#allocation5 + $0x188] sm:$0xff]
    %v137 = vld [vmem:[#allocation5 + $0x190] sm:$0xff]
    %v138 = vld [vmem:[#allocation5 + $0x198] sm:$0xff]
    %v139 = vld [vmem:[#allocation5 + $0x1a0] sm:$0xff]
    %v140 = vld [vmem:[#allocation5 + $0x1a8] sm:$0xff]
    %v141 = vld [vmem:[#allocation5 + $0x1b0] sm:$0xff]
    %v142 = vld [vmem:[#allocation5 + $0x1b8] sm:$0xff]
    %v143 = vld [vmem:[#allocation5 + $0x1c0] sm:$0xff]
    %v144 = vld [vmem:[#allocation5 + $0x1c8] sm:$0xff]
    %v145 = vld [vmem:[#allocation5 + $0x1d0] sm:$0xff]
    %v146 = vld [vmem:[#allocation5 + $0x1d8] sm:$0xff]
    %v147 = vld [vmem:[#allocation5 + $0x1e0] sm:$0xff]
    %v148 = vld [vmem:[#allocation5 + $0x1e8] sm:$0xff]
    %v149 = vld [vmem:[#allocation5 + $0x1f0] sm:$0xff]
    %v150 = vld [vmem:[#allocation5 + $0x1f8] sm:$0xff]
    %v151 = vld [vmem:[#allocation7] sm:$0xf]
    %v153 = vlaneseq
    %v154 = vshrl.u32 %v153, 7
    %v155 = vsub.s32 0, %v154
    %v156 = vrot.slane %v151, %v155
    %v157 = vlaneseq
    %v158 = vshrl.u32 %v157, 7
    %v159 = vsub.s32 1, %v158
    %v160 = vrot.slane %v151, %v159
    %v161 = vlaneseq
    %v162 = vshrl.u32 %v161, 7
    %v163 = vsub.s32 2, %v162
    %v164 = vrot.slane %v151, %v163
    %v165 = vlaneseq
    %v166 = vshrl.u32 %v165, 7
    %v167 = vsub.s32 3, %v166
    %v168 = vrot.slane %v151, %v167
    %173 = vmatprep.subr.mxu0 %v88
    %174 = vmatpush1.msra.mxu0 %v87
    %175 = vmatprep.subr.mxu0 %v92
    %176 = vmatpush1.msra.mxu0 %v91
    %177 = vmatprep.subr.mxu0 %v96
    %178 = vmatpush1.msra.mxu0 %v95
    %179 = vmatprep.subr.mxu0 %v100
    %180 = vmatpush1.msra.mxu0 %v99
    %181 = vmatprep.subr.mxu0 %v104
    %182 = vmatpush1.msra.mxu0 %v103
    %183 = vmatprep.subr.mxu0 %v108
    %184 = vmatpush1.msra.mxu0 %v107
    %185 = vmatprep.subr.mxu0 %v112
    %186 = vmatpush1.msra.mxu0 %v111
    %187 = vmatprep.subr.mxu0 %v116
    %188 = vmatpush1.msra.mxu0 %v115
    %189 = vmatprep.subr.mxu0 %v120
    %190 = vmatpush1.msra.mxu0 %v119
    %191 = vmatprep.subr.mxu0 %v124
    %192 = vmatpush1.msra.mxu0 %v123
    %193 = vmatprep.subr.mxu0 %v128
    %194 = vmatpush1.msra.mxu0 %v127
    %195 = vmatprep.subr.mxu0 %v132
    %196 = vmatpush1.msra.mxu0 %v131
    %197 = vmatprep.subr.mxu0 %v136
    %198 = vmatpush1.msra.mxu0 %v135
    %199 = vmatprep.subr.mxu0 %v140
    %200 = vmatpush1.msra.mxu0 %v139
    %201 = vmatprep.subr.mxu0 %v144
    %202 = vmatpush1.msra.mxu0 %v143
    %203 = vmatprep.subr.mxu0 %v148
    %204 = vmatpush1.msra.mxu0 %v147
    %205 = vmatprep.subr.mxu0 0.0
    %206 = vmatpush1.msra.mxu0 0.0
    %207 = vmatprep.subr.mxu0 0.0
    %208 = vmatpush1.msra.mxu0 0.0
    %209 = vmatprep.subr.mxu0 0.0
    %210 = vmatpush1.msra.mxu0 0.0
    %211 = vmatprep.subr.mxu0 0.0
    %212 = vmatpush1.msra.mxu0 0.0
    %213 = vmatprep.subr.mxu0 0.0
    %214 = vmatpush1.msra.mxu0 0.0
    %215 = vmatprep.subr.mxu0 0.0
    %216 = vmatpush1.msra.mxu0 0.0
    %217 = vmatprep.subr.mxu0 0.0
    %218 = vmatpush1.msra.mxu0 0.0
    %219 = vmatprep.subr.mxu0 0.0
    %220 = vmatpush1.msra.mxu0 0.0
    %221 = vmatprep.subr.mxu0 0.0
    %222 = vmatpush1.msra.mxu0 0.0
    %223 = vmatprep.subr.mxu0 0.0
    %224 = vmatpush1.msra.mxu0 0.0
    %225 = vmatprep.subr.mxu0 0.0
    %226 = vmatpush1.msra.mxu0 0.0
    %227 = vmatprep.subr.mxu0 0.0
    %228 = vmatpush1.msra.mxu0 0.0
    %229 = vmatprep.subr.mxu0 0.0
    %230 = vmatpush1.msra.mxu0 0.0
    %231 = vmatprep.subr.mxu0 0.0
    %232 = vmatpush1.msra.mxu0 0.0
    %233 = vmatprep.subr.mxu0 0.0
    %234 = vmatpush1.msra.mxu0 0.0
    %235 = vmatprep.subr.mxu0 0.0
    %236 = vmatpush1.msra.mxu0 0.0
    %237 = vmatprep.mubr.f32.mxu0 0.0
    %238 = vmatmul.mubr.f32.gmra.mrb[0].mxu0 %v85
    %v239 = vpop.f32.mrb[0].mxu0
    %v240 = vadd.f32 %v156, %v239
    %v241 = vpop.f32.mrb[0].mxu0
    %v242 = vadd.f32 %v160, %v241
    %243 = vmatprep.mubr.f32.mxu0 0.0
    %244 = vmatmul.mubr.f32.gmra.mrb[0].mxu0 %v86
    %v245 = vpop.f32.mrb[0].mxu0
    %v246 = vadd.f32 %v156, %v245
    %v247 = vpop.f32.mrb[0].mxu0
    %v248 = vadd.f32 %v160, %v247
    %249 = vdwg.mxu0
    %250 = vmatprep.subr.mxu0 %v90
    %251 = vmatpush1.msra.mxu0 %v89
    %252 = vmatprep.subr.mxu0 %v94
    %253 = vmatpush1.msra.mxu0 %v93
    %254 = vmatprep.subr.mxu0 %v98
    %255 = vmatpush1.msra.mxu0 %v97
    %256 = vmatprep.subr.mxu0 %v102
    %257 = vmatpush1.msra.mxu0 %v101
    %258 = vmatprep.subr.mxu0 %v106
    %259 = vmatpush1.msra.mxu0 %v105
    %260 = vmatprep.subr.mxu0 %v110
    %261 = vmatpush1.msra.mxu0 %v109
    %262 = vmatprep.subr.mxu0 %v114
    %263 = vmatpush1.msra.mxu0 %v113
    %264 = vmatprep.subr.mxu0 %v118
    %265 = vmatpush1.msra.mxu0 %v117
    %266 = vmatprep.subr.mxu0 %v122
    %267 = vmatpush1.msra.mxu0 %v121
    %268 = vmatprep.subr.mxu0 %v126
    %269 = vmatpush1.msra.mxu0 %v125
    %270 = vmatprep.subr.mxu0 %v130
    %271 = vmatpush1.msra.mxu0 %v129
    %272 = vmatprep.subr.mxu0 %v134
    %273 = vmatpush1.msra.mxu0 %v133
    %274 = vmatprep.subr.mxu0 %v138
    %275 = vmatpush1.msra.mxu0 %v137
    %276 = vmatprep.subr.mxu0 %v142
    %277 = vmatpush1.msra.mxu0 %v141
    %278 = vmatprep.subr.mxu0 %v146
    %279 = vmatpush1.msra.mxu0 %v145
    %280 = vmatprep.subr.mxu0 %v150
    %281 = vmatpush1.msra.mxu0 %v149
    %282 = vmatprep.subr.mxu0 0.0
    %283 = vmatpush1.msra.mxu0 0.0
    %284 = vmatprep.subr.mxu0 0.0
    %285 = vmatpush1.msra.mxu0 0.0
    %286 = vmatprep.subr.mxu0 0.0
    %287 = vmatpush1.msra.mxu0 0.0
    %288 = vmatprep.subr.mxu0 0.0
    %289 = vmatpush1.msra.mxu0 0.0
    %290 = vmatprep.subr.mxu0 0.0
    %291 = vmatpush1.msra.mxu0 0.0
    %292 = vmatprep.subr.mxu0 0.0
    %293 = vmatpush1.msra.mxu0 0.0
    %294 = vmatprep.subr.mxu0 0.0
    %295 = vmatpush1.msra.mxu0 0.0
    %296 = vmatprep.subr.mxu0 0.0
    %297 = vmatpush1.msra.mxu0 0.0
    %298 = vmatprep.subr.mxu0 0.0
    %299 = vmatpush1.msra.mxu0 0.0
    %300 = vmatprep.subr.mxu0 0.0
    %301 = vmatpush1.msra.mxu0 0.0
    %302 = vmatprep.subr.mxu0 0.0
    %303 = vmatpush1.msra.mxu0 0.0
    %304 = vmatprep.subr.mxu0 0.0
    %305 = vmatpush1.msra.mxu0 0.0
    %306 = vmatprep.subr.mxu0 0.0
    %307 = vmatpush1.msra.mxu0 0.0
    %308 = vmatprep.subr.mxu0 0.0
    %309 = vmatpush1.msra.mxu0 0.0
    %310 = vmatprep.subr.mxu0 0.0
    %311 = vmatpush1.msra.mxu0 0.0
    %312 = vmatprep.subr.mxu0 0.0
    %313 = vmatpush1.msra.mxu0 0.0
    %314 = vmatprep.mubr.f32.mxu0 0.0
    %315 = vmatmul.mubr.f32.gmra.mrb[0].mxu0 %v85
    %v316 = vpop.f32.mrb[0].mxu0
    %v317 = vadd.f32 %v164, %v316
    %v318 = vpop.f32.mrb[0].mxu0
    %v319 = vadd.f32 %v168, %v318
    %320 = vmatprep.mubr.f32.mxu0 0.0
    %321 = vmatmul.mubr.f32.gmra.mrb[0].mxu0 %v86
    %v322 = vpop.f32.mrb[0].mxu0
    %v323 = vadd.f32 %v164, %v322
    %v324 = vpop.f32.mrb[0].mxu0
    %v325 = vadd.f32 %v168, %v324
    %326 = vdwg.mxu0
    %v327 = vmul.f32 %v240, 0.5
    %v328 = vmul.f32 %v242, 0.5
    %v329 = vmul.f32 %v317, 0.5
    %v330 = vmul.f32 %v319, 0.5
    %v331 = vmul.f32 %v246, 0.5
    %v332 = vmul.f32 %v248, 0.5
    %v333 = vmul.f32 %v323, 0.5
    %v334 = vmul.f32 %v325, 0.5
    %v335 = vmul.f32 %v240, 0.70710677
    %v336 = vmul.f32 %v242, 0.70710677
    %v337 = vmul.f32 %v317, 0.70710677
    %v338 = vmul.f32 %v319, 0.70710677
    %v339 = vmul.f32 %v246, 0.70710677
    %v340 = vmul.f32 %v248, 0.70710677
    %v341 = vmul.f32 %v323, 0.70710677
    %v342 = vmul.f32 %v325, 0.70710677
    %v343 = verf.f32.pop %v335
    %v344 = verf.f32.pop %v336
    %v345 = verf.f32.pop %v337
    %v346 = verf.f32.pop %v338
    %v347 = verf.f32.pop %v339
    %v348 = verf.f32.pop %v340
    %v349 = verf.f32.pop %v341
    %v350 = verf.f32.pop %v342
    %v351 = vadd.f32 %v343, 1.0
    %v352 = vadd.f32 %v344, 1.0
    %v353 = vadd.f32 %v345, 1.0
    %v354 = vadd.f32 %v346, 1.0
    %v355 = vadd.f32 %v347, 1.0
    %v356 = vadd.f32 %v348, 1.0
    %v357 = vadd.f32 %v349, 1.0
    %v358 = vadd.f32 %v350, 1.0
    %v359 = vmul.f32 %v327, %v351
    %v360 = vmul.f32 %v328, %v352
    %v361 = vmul.f32 %v329, %v353
    %v362 = vmul.f32 %v330, %v354
    %v363 = vmul.f32 %v331, %v355
    %v364 = vmul.f32 %v332, %v356
    %v365 = vmul.f32 %v333, %v357
    %v366 = vmul.f32 %v334, %v358
    %v367 = vld [vmem:[#allocation8] sm:$0xff]
    %v368 = vld [vmem:[#allocation8 + $0x8] sm:$0xff]
    %v369 = vld [vmem:[#allocation8 + $0x10] sm:$0xff]
    %v370 = vld [vmem:[#allocation8 + $0x18] sm:$0xff]
    %v371 = vld [vmem:[#allocation8 + $0x20] sm:$0xff]
    %v372 = vld [vmem:[#allocation8 + $0x28] sm:$0xff]
    %v373 = vld [vmem:[#allocation8 + $0x30] sm:$0xff]
    %v374 = vld [vmem:[#allocation8 + $0x38] sm:$0xff]
    %v375 = vld [vmem:[#allocation8 + $0x40] sm:$0xff]
    %v376 = vld [vmem:[#allocation8 + $0x48] sm:$0xff]
    %v377 = vld [vmem:[#allocation8 + $0x50] sm:$0xff]
    %v378 = vld [vmem:[#allocation8 + $0x58] sm:$0xff]
    %v379 = vld [vmem:[#allocation8 + $0x60] sm:$0xff]
    %v380 = vld [vmem:[#allocation8 + $0x68] sm:$0xff]
    %v381 = vld [vmem:[#allocation8 + $0x70] sm:$0xff]
    %v382 = vld [vmem:[#allocation8 + $0x78] sm:$0xff]
    %v383 = vld [vmem:[#allocation8 + $0x80] sm:$0xff]
    %v384 = vld [vmem:[#allocation8 + $0x88] sm:$0xff]
    %v385 = vld [vmem:[#allocation8 + $0x90] sm:$0xff]
    %v386 = vld [vmem:[#allocation8 + $0x98] sm:$0xff]
    %v387 = vld [vmem:[#allocation8 + $0xa0] sm:$0xff]
    %v388 = vld [vmem:[#allocation8 + $0xa8] sm:$0xff]
    %v389 = vld [vmem:[#allocation8 + $0xb0] sm:$0xff]
    %v390 = vld [vmem:[#allocation8 + $0xb8] sm:$0xff]
    %v391 = vld [vmem:[#allocation8 + $0xc0] sm:$0xff]
    %v392 = vld [vmem:[#allocation8 + $0xc8] sm:$0xff]
    %v393 = vld [vmem:[#allocation8 + $0xd0] sm:$0xff]
    %v394 = vld [vmem:[#allocation8 + $0xd8] sm:$0xff]
    %v395 = vld [vmem:[#allocation8 + $0xe0] sm:$0xff]
    %v396 = vld [vmem:[#allocation8 + $0xe8] sm:$0xff]
    %v397 = vld [vmem:[#allocation8 + $0xf0] sm:$0xff]
    %v398 = vld [vmem:[#allocation8 + $0xf8] sm:$0xff]
    %v399 = vld [vmem:[#allocation8 + $0x100] sm:$0xff]
    %v400 = vld [vmem:[#allocation8 + $0x108] sm:$0xff]
    %v401 = vld [vmem:[#allocation8 + $0x110] sm:$0xff]
    %v402 = vld [vmem:[#allocation8 + $0x118] sm:$0xff]
    %v403 = vld [vmem:[#allocation8 + $0x120] sm:$0xff]
    %v404 = vld [vmem:[#allocation8 + $0x128] sm:$0xff]
    %v405 = vld [vmem:[#allocation8 + $0x130] sm:$0xff]
    %v406 = vld [vmem:[#allocation8 + $0x138] sm:$0xff]
    %v407 = vld [vmem:[#allocation8 + $0x140] sm:$0xff]
    %v408 = vld [vmem:[#allocation8 + $0x148] sm:$0xff]
    %v409 = vld [vmem:[#allocation8 + $0x150] sm:$0xff]
    %v410 = vld [vmem:[#allocation8 + $0x158] sm:$0xff]
    %v411 = vld [vmem:[#allocation8 + $0x160] sm:$0xff]
    %v412 = vld [vmem:[#allocation8 + $0x168] sm:$0xff]
    %v413 = vld [vmem:[#allocation8 + $0x170] sm:$0xff]
    %v414 = vld [vmem:[#allocation8 + $0x178] sm:$0xff]
    %v415 = vld [vmem:[#allocation8 + $0x180] sm:$0xff]
    %v416 = vld [vmem:[#allocation8 + $0x188] sm:$0xff]
    %v417 = vld [vmem:[#allocation8 + $0x190] sm:$0xff]
    %v418 = vld [vmem:[#allocation8 + $0x198] sm:$0xff]
    %v419 = vld [vmem:[#allocation8 + $0x1a0] sm:$0xff]
    %v420 = vld [vmem:[#allocation8 + $0x1a8] sm:$0xff]
    %v421 = vld [vmem:[#allocation8 + $0x1b0] sm:$0xff]
    %v422 = vld [vmem:[#allocation8 + $0x1b8] sm:$0xff]
    %v423 = vld [vmem:[#allocation8 + $0x1c0] sm:$0xff]
    %v424 = vld [vmem:[#allocation8 + $0x1c8] sm:$0xff]
    %v425 = vld [vmem:[#allocation8 + $0x1d0] sm:$0xff]
    %v426 = vld [vmem:[#allocation8 + $0x1d8] sm:$0xff]
    %v427 = vld [vmem:[#allocation8 + $0x1e0] sm:$0xff]
    %v428 = vld [vmem:[#allocation8 + $0x1e8] sm:$0xff]
    %v429 = vld [vmem:[#allocation8 + $0x1f0] sm:$0xff]
    %v430 = vld [vmem:[#allocation8 + $0x1f8] sm:$0xff]
    %v431 = vld [vmem:[#allocation10] sm:$0x1]
    %v433 = vlaneseq
    %v434 = vshrl.u32 %v433, 7
    %v435 = vsub.s32 0, %v434
    %v436 = vrot.slane %v431, %v435
    %438 = vmatprep.subr.mxu0 0.0
    %439 = vmatpush1.msra.mxu0 %v367
    %440 = vmatprep.subr.mxu0 0.0
    %441 = vmatpush1.msra.mxu0 %v368
    %442 = vmatprep.subr.mxu0 0.0
    %443 = vmatpush1.msra.mxu0 %v369
    %444 = vmatprep.subr.mxu0 0.0
    %445 = vmatpush1.msra.mxu0 %v370
    %446 = vmatprep.subr.mxu0 0.0
    %447 = vmatpush1.msra.mxu0 %v371
    %448 = vmatprep.subr.mxu0 0.0
    %449 = vmatpush1.msra.mxu0 %v372
    %450 = vmatprep.subr.mxu0 0.0
    %451 = vmatpush1.msra.mxu0 %v373
    %452 = vmatprep.subr.mxu0 0.0
    %453 = vmatpush1.msra.mxu0 %v374
    %454 = vmatprep.subr.mxu0 0.0
    %455 = vmatpush1.msra.mxu0 %v375
    %456 = vmatprep.subr.mxu0 0.0
    %457 = vmatpush1.msra.mxu0 %v376
    %458 = vmatprep.subr.mxu0 0.0
    %459 = vmatpush1.msra.mxu0 %v377
    %460 = vmatprep.subr.mxu0 0.0
    %461 = vmatpush1.msra.mxu0 %v378
    %462 = vmatprep.subr.mxu0 0.0
    %463 = vmatpush1.msra.mxu0 %v379
    %464 = vmatprep.subr.mxu0 0.0
    %465 = vmatpush1.msra.mxu0 %v380
    %466 = vmatprep.subr.mxu0 0.0
    %467 = vmatpush1.msra.mxu0 %v381
    %468 = vmatprep.subr.mxu0 0.0
    %469 = vmatpush1.msra.mxu0 %v382
    %470 = vmatprep.subr.mxu0 0.0
    %471 = vmatpush1.msra.mxu0 %v383
    %472 = vmatprep.subr.mxu0 0.0
    %473 = vmatpush1.msra.mxu0 %v384
    %474 = vmatprep.subr.mxu0 0.0
    %475 = vmatpush1.msra.mxu0 %v385
    %476 = vmatprep.subr.mxu0 0.0
    %477 = vmatpush1.msra.mxu0 %v386
    %478 = vmatprep.subr.mxu0 0.0
    %479 = vmatpush1.msra.mxu0 %v387
    %480 = vmatprep.subr.mxu0 0.0
    %481 = vmatpush1.msra.mxu0 %v388
    %482 = vmatprep.subr.mxu0 0.0
    %483 = vmatpush1.msra.mxu0 %v389
    %484 = vmatprep.subr.mxu0 0.0
    %485 = vmatpush1.msra.mxu0 %v390
    %486 = vmatprep.subr.mxu0 0.0
    %487 = vmatpush1.msra.mxu0 %v391
    %488 = vmatprep.subr.mxu0 0.0
    %489 = vmatpush1.msra.mxu0 %v392
    %490 = vmatprep.subr.mxu0 0.0
    %491 = vmatpush1.msra.mxu0 %v393
    %492 = vmatprep.subr.mxu0 0.0
    %493 = vmatpush1.msra.mxu0 %v394
    %494 = vmatprep.subr.mxu0 0.0
    %495 = vmatpush1.msra.mxu0 %v395
    %496 = vmatprep.subr.mxu0 0.0
    %497 = vmatpush1.msra.mxu0 %v396
    %498 = vmatprep.subr.mxu0 0.0
    %499 = vmatpush1.msra.mxu0 %v397
    %500 = vmatprep.subr.mxu0 0.0
    %501 = vmatpush1.msra.mxu0 %v398
    %502 = vmatprep.mubr.f32.mxu0 %v360
    %503 = vmatmul.mubr.f32.gmra.mrb[0].mxu0 %v359
    %v504 = vpop.f32.mrb[0].mxu0
    %v505 = vadd.f32 %v436, %v504
    %v506 = vpop.f32.mrb[0].mxu0
    %507 = vmatprep.mubr.f32.mxu0 %v364
    %508 = vmatmul.mubr.f32.gmra.mrb[0].mxu0 %v363
    %v509 = vpop.f32.mrb[0].mxu0
    %v510 = vadd.f32 %v436, %v509
    %v511 = vpop.f32.mrb[0].mxu0
    %512 = vdwg.mxu0
    %513 = vmatprep.subr.mxu0 0.0
    %514 = vmatpush1.msra.mxu0 %v399
    %515 = vmatprep.subr.mxu0 0.0
    %516 = vmatpush1.msra.mxu0 %v400
    %517 = vmatprep.subr.mxu0 0.0
    %518 = vmatpush1.msra.mxu0 %v401
    %519 = vmatprep.subr.mxu0 0.0
    %520 = vmatpush1.msra.mxu0 %v402
    %521 = vmatprep.subr.mxu0 0.0
    %522 = vmatpush1.msra.mxu0 %v403
    %523 = vmatprep.subr.mxu0 0.0
    %524 = vmatpush1.msra.mxu0 %v404
    %525 = vmatprep.subr.mxu0 0.0
    %526 = vmatpush1.msra.mxu0 %v405
    %527 = vmatprep.subr.mxu0 0.0
    %528 = vmatpush1.msra.mxu0 %v406
    %529 = vmatprep.subr.mxu0 0.0
    %530 = vmatpush1.msra.mxu0 %v407
    %531 = vmatprep.subr.mxu0 0.0
    %532 = vmatpush1.msra.mxu0 %v408
    %533 = vmatprep.subr.mxu0 0.0
    %534 = vmatpush1.msra.mxu0 %v409
    %535 = vmatprep.subr.mxu0 0.0
    %536 = vmatpush1.msra.mxu0 %v410
    %537 = vmatprep.subr.mxu0 0.0
    %538 = vmatpush1.msra.mxu0 %v411
    %539 = vmatprep.subr.mxu0 0.0
    %540 = vmatpush1.msra.mxu0 %v412
    %541 = vmatprep.subr.mxu0 0.0
    %542 = vmatpush1.msra.mxu0 %v413
    %543 = vmatprep.subr.mxu0 0.0
    %544 = vmatpush1.msra.mxu0 %v414
    %545 = vmatprep.subr.mxu0 0.0
    %546 = vmatpush1.msra.mxu0 %v415
    %547 = vmatprep.subr.mxu0 0.0
    %548 = vmatpush1.msra.mxu0 %v416
    %549 = vmatprep.subr.mxu0 0.0
    %550 = vmatpush1.msra.mxu0 %v417
    %551 = vmatprep.subr.mxu0 0.0
    %552 = vmatpush1.msra.mxu0 %v418
    %553 = vmatprep.subr.mxu0 0.0
    %554 = vmatpush1.msra.mxu0 %v419
    %555 = vmatprep.subr.mxu0 0.0
    %556 = vmatpush1.msra.mxu0 %v420
    %557 = vmatprep.subr.mxu0 0.0
    %558 = vmatpush1.msra.mxu0 %v421
    %559 = vmatprep.subr.mxu0 0.0
    %560 = vmatpush1.msra.mxu0 %v422
    %561 = vmatprep.subr.mxu0 0.0
    %562 = vmatpush1.msra.mxu0 %v423
    %563 = vmatprep.subr.mxu0 0.0
    %564 = vmatpush1.msra.mxu0 %v424
    %565 = vmatprep.subr.mxu0 0.0
    %566 = vmatpush1.msra.mxu0 %v425
    %567 = vmatprep.subr.mxu0 0.0
    %568 = vmatpush1.msra.mxu0 %v426
    %569 = vmatprep.subr.mxu0 0.0
    %570 = vmatpush1.msra.mxu0 %v427
    %571 = vmatprep.subr.mxu0 0.0
    %572 = vmatpush1.msra.mxu0 %v428
    %573 = vmatprep.subr.mxu0 0.0
    %574 = vmatpush1.msra.mxu0 %v429
    %575 = vmatprep.subr.mxu0 0.0
    %576 = vmatpush1.msra.mxu0 %v430
    %577 = vmatprep.mubr.f32.mxu0 %v362
    %578 = vmatmul.mubr.f32.gmra.mrb[0].mxu0 %v361
    %v579 = vpop.f32.mrb[0].mxu0
    %v580 = vadd.f32 %v505, %v579
    %v581 = vpop.f32.mrb[0].mxu0
    %582 = vmatprep.mubr.f32.mxu0 %v366
    %583 = vmatmul.mubr.f32.gmra.mrb[0].mxu0 %v365
    %v584 = vpop.f32.mrb[0].mxu0
    %v585 = vadd.f32 %v510, %v584
    %v586 = vpop.f32.mrb[0].mxu0
    %587 = vdwg.mxu0
    %588 = vst [vmem:[#allocation11] sm:$0xff] %v580
    %589 = vst [vmem:[#allocation11 + $0x8] sm:$0xff] %v585
    // Predicated region
    $region42: #{_feed_forward_jit.1} parent=1 // pred_check
      _
    $region43: #{_feed_forward_jit.1} parent=1 // pred_check_branch
      %591 = sbr.rel (0) target = $region45
    $region44: #{_feed_forward_jit.1} parent=1 // pred_region
      %s593 = ssub.s32 256, 256
      %594 = vsyncadd [#allocation4], %s593
      %s595 = sshll.u32 [#allocation11], 4
      %s596 = int_to_ptr.vmem [resolvable:$true] %s595
      %601 = dma.vmem_to_hbm [thread:$0]  %s596, 256, %s5, [#allocation4], 128, 128, 8
    $region45: #{_feed_forward_jit.1} parent=1 // pred_fallthru
      _
    // Predicated region
    $region46: #{_feed_forward_jit.1} parent=1 // pred_check
      _
    $region47: #{_feed_forward_jit.1} parent=1 // pred_check_branch
      %603 = sbr.rel (0) target = $region49
    $region48: #{_feed_forward_jit.1} parent=1 // pred_region
      %604 = dma.done [#allocation4], 256
    $region49: #{_feed_forward_jit.1} parent=1 // pred_fallthru
      _
    %605 = vsyncpa [#allocation3], 1
    %606 = vsyncpa [#allocation6], 1
    %607 = vsyncpa [#allocation9], 1
    %608 = vsyncpa [#allocation4], 1

</llo_original>
